<compile_context>
chip_gen: v7x
topology: tpu7x:2x2x1
jax: 0.10.0
libtpu: 0.0.40
codegen_flags: <defaults>
</compile_context>

<pallas_src>
import functools

import numpy as np
import jax
import jax.numpy as jnp
from jax import lax
from jax.experimental import pallas as pl
from jax.experimental.pallas import tpu as pltpu

LANE = 128


def _round_up(x, m):
    return (x + m - 1) // m * m


def compute_combinations(M, N):
    """Same recurrence as Mapping.compute_combinations (Pascal's triangle)."""
    c = np.zeros((M + 1, N + 1), dtype=np.int64)
    c[:, 0] = 1
    for m in range(1, M + 1):
        for n in range(1, min(m, N) + 1):
            c[m, n] = c[m - 1, n - 1] + c[m - 1, n]
    return c


# ----------------------------------------------------------------------------
# Phase 1: Mapping indices + validity, batch on the lane axis
# ----------------------------------------------------------------------------
def _index_kernel(sl_ref, comb_u_ref, comb_d_ref, xu_ref, xd_ref, packed_ref,
                  *, M, Nu, Nd):
    xu = xu_ref[...]                          # [M, TB] bf16, values 0/1
    xd = xd_ref[...]                          # [M, TB] bf16, values 0/1
    sl = sl_ref[...]                          # [M+1, M] bf16 (0/1 exact)

    def mapping(x, comb_ref, N):
        # one MXU pass gives both exclusive prefix sums and the total count
        pt = jnp.dot(sl, x, preferred_element_type=jnp.float32).astype(jnp.int32)
        TB = pt.shape[1]
        prefix = pt[:M, :]                    # [M, TB] exclusive prefix sums
        total = pt[M:M + 1, :]                # [1, TB] per-sample totals
        # left[i,b] = N - (# ones before site i); clamp is a no-op for valid
        # samples (invalid samples are discarded below, matching torch).
        left = jnp.clip(N - prefix, 0, N)
        combv = comb_ref[...]                 # [M, N+1] rows reversed, int32
        coeff = jnp.zeros((M, TB), jnp.int32)
        for n in range(N + 1):                # tiny static unroll
            col = combv[:, n:n + 1]           # [M, 1]
            coeff = coeff + jnp.where(left == n, col, 0)
        term = jnp.where(x != 0, coeff, 0)    # coeff only where x_i == 1
        idx = jnp.sum(term, axis=0, keepdims=True)   # [1, TB] int32
        return idx, total

    i_up, t_up = mapping(xu, comb_u_ref, Nu)
    i_dn, t_dn = mapping(xd, comb_d_ref, Nd)
    valid_b = jnp.logical_and(t_up == Nu, t_dn == Nd)          # [1, TB] bool
    valid = valid_b.astype(jnp.int32)

    # row/blk are always in-range addresses (0 for invalid samples); mod == 128
    # for invalid samples so the phase-2 lane-compare selects nothing -> 0.
    row = i_up * valid
    idn_safe = i_dn * valid
    blk = jnp.right_shift(idn_safe, 7)                         # // 128
    mod = jnp.where(valid_b, jnp.bitwise_and(idn_safe, 127), LANE)

    packed_ref[0:1, :] = row
    packed_ref[1:2, :] = blk
    packed_ref[2:3, :] = mod


# ----------------------------------------------------------------------------
# Phase 2: batched manual gather (scalar-prefetched indices, table in HBM)
# ----------------------------------------------------------------------------
def _gather_kernel(packed_ref, mod_ref, wf_ref, out_ref, vbuf, sem, *, TBG):
    # packed_ref: (3, Bp) int32 in SMEM (scalar prefetch)
    # mod_ref:    (TBG, 1) int32 block in VMEM (in-slab lane index, 128=invalid)
    # wf_ref:     (space_up, nblk, 128) f32 in HBM (memory_space=pl.ANY)
    # vbuf:       (TBG, 128) f32 VMEM scratch, one slab per sample
    base = pl.program_id(0) * TBG

    @pl.loop(0, TBG)
    def _issue(s):
        b = base + s
        row = packed_ref[0, b]
        blk = packed_ref[1, b]
        pltpu.make_async_copy(
            wf_ref.at[row, pl.ds(blk, 1), :],     # (1, 128) = 512 B slab
            vbuf.at[pl.ds(s, 1), :],
            sem.at[0],
        ).start()

    @pl.loop(0, TBG)
    def _drain(s):
        # same-sized descriptor; one wait per issued copy (shared semaphore)
        pltpu.make_async_copy(
            wf_ref.at[0, pl.ds(0, 1), :],
            vbuf.at[pl.ds(s, 1), :],
            sem.at[0],
        ).wait()

    lanes = lax.broadcasted_iota(jnp.int32, (TBG, LANE), 1)
    sel = jnp.where(lanes == mod_ref[...], vbuf[...], 0.0)
    out_ref[...] = jnp.sum(sel, axis=1, keepdims=True)         # (TBG, 1) f32


# ----------------------------------------------------------------------------
# Module wrapper
# ----------------------------------------------------------------------------
class RealWaveFunction:
    def __init__(self, L1, L2, orbit, dimension, spin_up, spin_down, *, key):
        assert dimension == 2
        self.half_site = L1 * L2 * orbit // 2
        self.spin_up = spin_up
        self.spin_down = spin_down
        M = self.half_site

        comb_up = compute_combinations(M, spin_up)
        comb_dn = compute_combinations(M, spin_down)
        self.space_up = int(comb_up[M, spin_up])
        self.space_dn = int(comb_dn[M, spin_down])
        # int32 exactness assumptions (torch uses int64/float64)
        assert int(comb_up.max()) < 2 ** 31 and int(comb_dn.max()) < 2 ** 31
        assert M < 2 ** 24

        # reversed-row tables: comb_rev[i, :] == comb[M - 1 - i, :]
        self.comb_up_rev = jnp.asarray(comb_up[M - 1::-1, :], jnp.int32)
        self.comb_dn_rev = jnp.asarray(comb_dn[M - 1::-1, :], jnp.int32)
        self._comb_up_np = comb_up
        self._comb_dn_np = comb_dn

        # [M+1, M]: rows 0..M-1 strictly-lower-triangular, row M all ones.
        # Stored as bf16 on the host (0/1 exact) -> no in-kernel cast.
        self.sl_aug = jnp.asarray(
            np.tril(np.ones((M + 1, M), np.float32), k=-1), jnp.bfloat16)

        # torch.randn float64 parameter -> deterministic float32 here
        self.wave_function = jax.random.normal(
            key, (self.space_up, self.space_dn), dtype=jnp.float32)

        # 128-lane slab view of the table for the manual gather DMAs:
        # (space_up, nblk, 128), zero padded on the last axis so every
        # (row, blk) slab is a full in-range 512-B read; the padded lanes are
        # never selected (mod < space_dn % 128 for valid samples in the last
        # slab, mod == 128 for invalid samples).
        W = _round_up(self.space_dn, LANE)
        self.n_col_blocks = W // LANE
        self.wf_slabs = jnp.pad(
            self.wave_function, ((0, 0), (0, W - self.space_dn))
        ).reshape(self.space_up, self.n_col_blocks, LANE)

    def __call__(self, x):
        B = x.shape[0]
        M = self.half_site
        Nu, Nd = self.spin_up, self.spin_down

        xf = jnp.asarray(x).reshape(B, -1)
        x_up = xf[:, 0::2].astype(jnp.bfloat16)   # 0/1, exact in bf16
        x_dn = xf[:, 1::2].astype(jnp.bfloat16)

        # batch tiling: one padded batch size shared by both phases
        if B >= 1024:
            TB = 1024
        elif B >= 512:
            TB = 512
        else:
            TB = LANE
        Bp = _round_up(B, TB)
        TBG = next(c for c in (512, 256, 128) if Bp % c == 0)

        pad = Bp - B
        xu_t = jnp.pad(x_up, ((0, pad), (0, 0))).T     # [M, Bp] bf16
        xd_t = jnp.pad(x_dn, ((0, pad), (0, 0))).T     # [M, Bp] bf16

        # ------------- phase 1: packed (row, slab, lane) indices -------------
        idx_kernel = functools.partial(_index_kernel, M=M, Nu=Nu, Nd=Nd)
        cost1 = pl.CostEstimate(
            flops=2 * (M + 1) * M * Bp + 8 * (Nu + Nd + 2) * M * Bp,
            transcendentals=0,
            bytes_accessed=2 * M * Bp * 2 + 3 * Bp * 4)
        packed = pl.pallas_call(
            idx_kernel,
            out_shape=jax.ShapeDtypeStruct((3, Bp), jnp.int32),
            grid=(Bp // TB,),
            in_specs=[
                pl.BlockSpec((M + 1, M), lambda i: (0, 0)),
                pl.BlockSpec((M, Nu + 1), lambda i: (0, 0)),
                pl.BlockSpec((M, Nd + 1), lambda i: (0, 0)),
                pl.BlockSpec((M, TB), lambda i: (0, i)),
                pl.BlockSpec((M, TB), lambda i: (0, i)),
            ],
            out_specs=pl.BlockSpec((3, TB), lambda i: (0, i)),
            compiler_params=pltpu.CompilerParams(
                dimension_semantics=("parallel",)),
            cost_estimate=cost1,
        )(self.sl_aug, self.comb_up_rev, self.comb_dn_rev, xu_t, xd_t)

        # in-slab lane index, sublane-oriented for the phase-2 compare
        mod_col = packed[2].reshape(Bp, 1)

        # ------------- phase 2: batched manual gather -------------------------
        gather_kernel = functools.partial(_gather_kernel, TBG=TBG)
        cost2 = pl.CostEstimate(
            flops=3 * Bp * LANE,
            transcendentals=0,
            bytes_accessed=Bp * LANE * 4 + Bp * 4 * 4)
        out = pl.pallas_call(
            gather_kernel,
            out_shape=jax.ShapeDtypeStruct((Bp, 1), jnp.float32),
            grid_spec=pltpu.PrefetchScalarGridSpec(
                num_scalar_prefetch=1,
                grid=(Bp // TBG,),
                in_specs=[
                    pl.BlockSpec((TBG, 1), lambda t, pk: (t, 0)),
                    pl.BlockSpec(memory_space=pl.ANY),
                ],
                out_specs=pl.BlockSpec((TBG, 1), lambda t, pk: (t, 0)),
                scratch_shapes=[
                    pltpu.VMEM((TBG, LANE), jnp.float32),
                    pltpu.SemaphoreType.DMA((1,)),
                ],
            ),
            compiler_params=pltpu.CompilerParams(
                dimension_semantics=("parallel",)),
            cost_estimate=cost2,
        )(packed, mod_col, self.wf_slabs)

        return out[:B, 0]

    # pure numpy reference (mirrors the torch code) for verification
    def reference(self, x):
        x = np.asarray(x).reshape(x.shape[0], -1).astype(np.int64)
        xu, xd = x[:, 0::2], x[:, 1::2]
        M = self.half_site

        def mapping(xs, comb, N):
            idx = np.zeros(xs.shape[0], dtype=np.int64)
            left = np.full(xs.shape[0], N, dtype=np.int64)
            for i in range(M):
                xi = xs[:, i]
                # clip only affects invalid samples (discarded by `valid` below)
                idx = idx + comb[M - 1 - i, np.clip(left, 0, N)] * xi
                left = left - xi
            return idx

        i_up = mapping(xu, self._comb_up_np, self.spin_up)
        i_dn = mapping(xd, self._comb_dn_np, self.spin_down)
        valid = (xu.sum(-1) == self.spin_up) & (xd.sum(-1) == self.spin_down)
        wf = np.asarray(self.wave_function)
        return np.where(valid, wf[i_up * valid, i_dn * valid], 0.0)


# ----------------------------------------------------------------------------
if __name__ == "__main__":
    # small config: L1=2, L2=2, orbit=2 -> 8 sites, half_site=4, spin 2/2
    L1, L2, orbit, dim = 2, 2, 2, 2
    spin_up, spin_down = 2, 2
    B = 8

    key = jax.random.PRNGKey(0)
    k_x, k_wf = jax.random.split(key)

    model = RealWaveFunction(L1, L2, orbit, dim, spin_up, spin_down, key=k_wf)

    x = jax.random.randint(k_x, (B, L1, L2, orbit), 0, 2, dtype=jnp.int32)
    # force sample 0 to be a valid configuration (2 up spins, 2 down spins)
    x = x.at[0].set(jnp.array([1, 1, 1, 1, 0, 0, 0, 0],
                              jnp.int32).reshape(L1, L2, orbit))

    out = model(x)
    out = jax.block_until_ready(out)

    ref = model.reference(np.asarray(x))
    np.testing.assert_allclose(np.asarray(out), ref.astype(np.float32),
                               rtol=1e-6, atol=1e-6)

    print("KERNEL_OK")
</pallas_src>

<mosaic_0001>
module attributes {stable_mosaic.version = 11 : i64} {
  func.func @_index_kernel(%arg0: i32, %arg1: memref<5x4xbf16, #tpu.memory_space<vmem>>, %arg2: memref<4x3xi32, #tpu.memory_space<vmem>>, %arg3: memref<4x3xi32, #tpu.memory_space<vmem>>, %arg4: memref<4x128xbf16, #tpu.memory_space<vmem>>, %arg5: memref<4x128xbf16, #tpu.memory_space<vmem>>, %arg6: memref<3x128xi32, #tpu.memory_space<vmem>>) attributes {dimension_semantics = [#tpu.dimension_semantics<parallel>], iteration_bounds = array<i64: 1>, scalar_prefetch = 0 : i64, scratch_operands = 0 : i64, tpu.core_type = #tpu.core_type<tc>, window_params = [{pipeline_mode = #tpu.pipeline_mode<synchronous>, transform_indices = @transform_0, window_bounds = array<i64: 5, 4>}, {pipeline_mode = #tpu.pipeline_mode<synchronous>, transform_indices = @transform_1, window_bounds = array<i64: 4, 3>}, {pipeline_mode = #tpu.pipeline_mode<synchronous>, transform_indices = @transform_2, window_bounds = array<i64: 4, 3>}, {transform_indices = @transform_3, window_bounds = array<i64: 4, 128>}, {transform_indices = @transform_4, window_bounds = array<i64: 4, 128>}, {transform_indices = @transform_5, window_bounds = array<i64: 3, 128>}]} {
    %c0 = arith.constant 0 : index
    %c0_0 = arith.constant 0 : index
    %0 = vector.load %arg4[%c0, %c0_0] : memref<4x128xbf16, #tpu.memory_space<vmem>>, vector<4x128xbf16>
    %c0_1 = arith.constant 0 : index
    %c0_2 = arith.constant 0 : index
    %1 = vector.load %arg5[%c0_1, %c0_2] : memref<4x128xbf16, #tpu.memory_space<vmem>>, vector<4x128xbf16>
    %c0_3 = arith.constant 0 : index
    %c0_4 = arith.constant 0 : index
    %2 = vector.load %arg1[%c0_3, %c0_4] : memref<5x4xbf16, #tpu.memory_space<vmem>>, vector<5x4xbf16>
    %cst = arith.constant dense<0.000000e+00> : vector<5x128xf32>
    %3 = tpu.matmul %2, %0, %cst {dimension_numbers = #tpu.dot_dimension_numbers<[1], [0], [0], [1], [0, 0, 1, 1], [], []>} : vector<5x4xbf16>, vector<4x128xbf16>, vector<5x128xf32> -> vector<5x128xf32>
    %4 = arith.fptosi %3 : vector<5x128xf32> to vector<5x128xi32>
    %5 = vector.extract_strided_slice %4 {offsets = [0, 0], sizes = [4, 128], strides = [1, 1]} : vector<5x128xi32> to vector<4x128xi32>
    %6 = vector.extract_strided_slice %4 {offsets = [4, 0], sizes = [1, 128], strides = [1, 1]} : vector<5x128xi32> to vector<1x128xi32>
    %c2_i32 = arith.constant 2 : i32
    %7 = vector.broadcast %c2_i32 : i32 to vector<4x128xi32>
    %8 = arith.subi %7, %5 : vector<4x128xi32>
    %c0_i32 = arith.constant 0 : i32
    %c2_i32_5 = arith.constant 2 : i32
    %9 = vector.broadcast %c0_i32 : i32 to vector<4x128xi32>
    %10 = arith.maxsi %9, %8 : vector<4x128xi32>
    %11 = vector.broadcast %c2_i32_5 : i32 to vector<4x128xi32>
    %12 = arith.minsi %11, %10 : vector<4x128xi32>
    %c0_6 = arith.constant 0 : index
    %c0_7 = arith.constant 0 : index
    %13 = vector.load %arg2[%c0_6, %c0_7] : memref<4x3xi32, #tpu.memory_space<vmem>>, vector<4x3xi32>
    %c0_i32_8 = arith.constant 0 : i32
    %14 = vector.broadcast %c0_i32_8 : i32 to vector<4x128xi32>
    %15 = vector.extract_strided_slice %13 {offsets = [0, 0], sizes = [4, 1], strides = [1, 1]} : vector<4x3xi32> to vector<4x1xi32>
    %c0_i32_9 = arith.constant 0 : i32
    %16 = vector.broadcast %c0_i32_9 : i32 to vector<4x128xi32>
    %17 = arith.cmpi eq, %12, %16 : vector<4x128xi32>
    %c0_i32_10 = arith.constant 0 : i32
    %18 = vector.shape_cast %15 : vector<4x1xi32> to vector<4x1xi32>
    %19 = vector.broadcast %18 : vector<4x1xi32> to vector<4x128xi32>
    %20 = vector.broadcast %c0_i32_10 : i32 to vector<4x128xi32>
    %21 = arith.select %17, %19, %20 : vector<4x128xi1>, vector<4x128xi32>
    %22 = arith.addi %14, %21 : vector<4x128xi32>
    %23 = vector.extract_strided_slice %13 {offsets = [0, 1], sizes = [4, 1], strides = [1, 1]} : vector<4x3xi32> to vector<4x1xi32>
    %c1_i32 = arith.constant 1 : i32
    %24 = vector.broadcast %c1_i32 : i32 to vector<4x128xi32>
    %25 = arith.cmpi eq, %12, %24 : vector<4x128xi32>
    %c0_i32_11 = arith.constant 0 : i32
    %26 = vector.shape_cast %23 : vector<4x1xi32> to vector<4x1xi32>
    %27 = vector.broadcast %26 : vector<4x1xi32> to vector<4x128xi32>
    %28 = vector.broadcast %c0_i32_11 : i32 to vector<4x128xi32>
    %29 = arith.select %25, %27, %28 : vector<4x128xi1>, vector<4x128xi32>
    %30 = arith.addi %22, %29 : vector<4x128xi32>
    %31 = vector.extract_strided_slice %13 {offsets = [0, 2], sizes = [4, 1], strides = [1, 1]} : vector<4x3xi32> to vector<4x1xi32>
    %c2_i32_12 = arith.constant 2 : i32
    %32 = vector.broadcast %c2_i32_12 : i32 to vector<4x128xi32>
    %33 = arith.cmpi eq, %12, %32 : vector<4x128xi32>
    %c0_i32_13 = arith.constant 0 : i32
    %34 = vector.shape_cast %31 : vector<4x1xi32> to vector<4x1xi32>
    %35 = vector.broadcast %34 : vector<4x1xi32> to vector<4x128xi32>
    %36 = vector.broadcast %c0_i32_13 : i32 to vector<4x128xi32>
    %37 = arith.select %33, %35, %36 : vector<4x128xi1>, vector<4x128xi32>
    %38 = arith.addi %30, %37 : vector<4x128xi32>
    %cst_14 = arith.constant 0.000000e+00 : bf16
    %39 = vector.broadcast %cst_14 : bf16 to vector<4x128xbf16>
    %40 = arith.cmpf one, %0, %39 : vector<4x128xbf16>
    %c0_i32_15 = arith.constant 0 : i32
    %41 = vector.broadcast %c0_i32_15 : i32 to vector<4x128xi32>
    %42 = arith.select %40, %38, %41 : vector<4x128xi1>, vector<4x128xi32>
    %cst_16 = arith.constant dense<0> : vector<128xi32>
    %43 = vector.multi_reduction <add>, %42, %cst_16 [0] : vector<4x128xi32> to vector<128xi32>
    %44 = vector.shape_cast %43 : vector<128xi32> to vector<1x128xi32>
    %cst_17 = arith.constant dense<0.000000e+00> : vector<5x128xf32>
    %45 = tpu.matmul %2, %1, %cst_17 {dimension_numbers = #tpu.dot_dimension_numbers<[1], [0], [0], [1], [0, 0, 1, 1], [], []>} : vector<5x4xbf16>, vector<4x128xbf16>, vector<5x128xf32> -> vector<5x128xf32>
    %46 = arith.fptosi %45 : vector<5x128xf32> to vector<5x128xi32>
    %47 = vector.extract_strided_slice %46 {offsets = [0, 0], sizes = [4, 128], strides = [1, 1]} : vector<5x128xi32> to vector<4x128xi32>
    %48 = vector.extract_strided_slice %46 {offsets = [4, 0], sizes = [1, 128], strides = [1, 1]} : vector<5x128xi32> to vector<1x128xi32>
    %c2_i32_18 = arith.constant 2 : i32
    %49 = vector.broadcast %c2_i32_18 : i32 to vector<4x128xi32>
    %50 = arith.subi %49, %47 : vector<4x128xi32>
    %c0_i32_19 = arith.constant 0 : i32
    %c2_i32_20 = arith.constant 2 : i32
    %51 = vector.broadcast %c0_i32_19 : i32 to vector<4x128xi32>
    %52 = arith.maxsi %51, %50 : vector<4x128xi32>
    %53 = vector.broadcast %c2_i32_20 : i32 to vector<4x128xi32>
    %54 = arith.minsi %53, %52 : vector<4x128xi32>
    %c0_21 = arith.constant 0 : index
    %c0_22 = arith.constant 0 : index
    %55 = vector.load %arg3[%c0_21, %c0_22] : memref<4x3xi32, #tpu.memory_space<vmem>>, vector<4x3xi32>
    %c0_i32_23 = arith.constant 0 : i32
    %56 = vector.broadcast %c0_i32_23 : i32 to vector<4x128xi32>
    %57 = vector.extract_strided_slice %55 {offsets = [0, 0], sizes = [4, 1], strides = [1, 1]} : vector<4x3xi32> to vector<4x1xi32>
    %c0_i32_24 = arith.constant 0 : i32
    %58 = vector.broadcast %c0_i32_24 : i32 to vector<4x128xi32>
    %59 = arith.cmpi eq, %54, %58 : vector<4x128xi32>
    %c0_i32_25 = arith.constant 0 : i32
    %60 = vector.shape_cast %57 : vector<4x1xi32> to vector<4x1xi32>
    %61 = vector.broadcast %60 : vector<4x1xi32> to vector<4x128xi32>
    %62 = vector.broadcast %c0_i32_25 : i32 to vector<4x128xi32>
    %63 = arith.select %59, %61, %62 : vector<4x128xi1>, vector<4x128xi32>
    %64 = arith.addi %56, %63 : vector<4x128xi32>
    %65 = vector.extract_strided_slice %55 {offsets = [0, 1], sizes = [4, 1], strides = [1, 1]} : vector<4x3xi32> to vector<4x1xi32>
    %c1_i32_26 = arith.constant 1 : i32
    %66 = vector.broadcast %c1_i32_26 : i32 to vector<4x128xi32>
    %67 = arith.cmpi eq, %54, %66 : vector<4x128xi32>
    %c0_i32_27 = arith.constant 0 : i32
    %68 = vector.shape_cast %65 : vector<4x1xi32> to vector<4x1xi32>
    %69 = vector.broadcast %68 : vector<4x1xi32> to vector<4x128xi32>
    %70 = vector.broadcast %c0_i32_27 : i32 to vector<4x128xi32>
    %71 = arith.select %67, %69, %70 : vector<4x128xi1>, vector<4x128xi32>
    %72 = arith.addi %64, %71 : vector<4x128xi32>
    %73 = vector.extract_strided_slice %55 {offsets = [0, 2], sizes = [4, 1], strides = [1, 1]} : vector<4x3xi32> to vector<4x1xi32>
    %c2_i32_28 = arith.constant 2 : i32
    %74 = vector.broadcast %c2_i32_28 : i32 to vector<4x128xi32>
    %75 = arith.cmpi eq, %54, %74 : vector<4x128xi32>
    %c0_i32_29 = arith.constant 0 : i32
    %76 = vector.shape_cast %73 : vector<4x1xi32> to vector<4x1xi32>
    %77 = vector.broadcast %76 : vector<4x1xi32> to vector<4x128xi32>
    %78 = vector.broadcast %c0_i32_29 : i32 to vector<4x128xi32>
    %79 = arith.select %75, %77, %78 : vector<4x128xi1>, vector<4x128xi32>
    %80 = arith.addi %72, %79 : vector<4x128xi32>
    %cst_30 = arith.constant 0.000000e+00 : bf16
    %81 = vector.broadcast %cst_30 : bf16 to vector<4x128xbf16>
    %82 = arith.cmpf one, %1, %81 : vector<4x128xbf16>
    %c0_i32_31 = arith.constant 0 : i32
    %83 = vector.broadcast %c0_i32_31 : i32 to vector<4x128xi32>
    %84 = arith.select %82, %80, %83 : vector<4x128xi1>, vector<4x128xi32>
    %cst_32 = arith.constant dense<0> : vector<128xi32>
    %85 = vector.multi_reduction <add>, %84, %cst_32 [0] : vector<4x128xi32> to vector<128xi32>
    %86 = vector.shape_cast %85 : vector<128xi32> to vector<1x128xi32>
    %c2_i32_33 = arith.constant 2 : i32
    %87 = vector.broadcast %c2_i32_33 : i32 to vector<1x128xi32>
    %88 = arith.cmpi eq, %6, %87 : vector<1x128xi32>
    %c2_i32_34 = arith.constant 2 : i32
    %89 = vector.broadcast %c2_i32_34 : i32 to vector<1x128xi32>
    %90 = arith.cmpi eq, %48, %89 : vector<1x128xi32>
    %91 = arith.andi %88, %90 : vector<1x128xi1>
    %92 = arith.extui %91 : vector<1x128xi1> to vector<1x128xi32>
    %93 = arith.muli %44, %92 : vector<1x128xi32>
    %94 = arith.muli %86, %92 : vector<1x128xi32>
    %c7_i32 = arith.constant 7 : i32
    %95 = vector.broadcast %c7_i32 : i32 to vector<1x128xi32>
    %96 = arith.shrsi %94, %95 : vector<1x128xi32>
    %c127_i32 = arith.constant 127 : i32
    %97 = vector.broadcast %c127_i32 : i32 to vector<1x128xi32>
    %98 = arith.andi %94, %97 : vector<1x128xi32>
    %c128_i32 = arith.constant 128 : i32
    %99 = vector.broadcast %c128_i32 : i32 to vector<1x128xi32>
    %100 = arith.select %91, %98, %99 : vector<1x128xi1>, vector<1x128xi32>
    %c0_35 = arith.constant 0 : index
    %c0_36 = arith.constant 0 : index
    %101 = vector.load %arg6[%c0_35, %c0_36] : memref<3x128xi32, #tpu.memory_space<vmem>>, vector<1x128xi32>
    tpu.vector_store %arg6[%c0_35, %c0_36], %93 {strides = array<i32>} : memref<3x128xi32, #tpu.memory_space<vmem>>, vector<1x128xi32>,
    %c1 = arith.constant 1 : index
    %c0_37 = arith.constant 0 : index
    %102 = vector.load %arg6[%c1, %c0_37] : memref<3x128xi32, #tpu.memory_space<vmem>>, vector<1x128xi32>
    tpu.vector_store %arg6[%c1, %c0_37], %96 {strides = array<i32>} : memref<3x128xi32, #tpu.memory_space<vmem>>, vector<1x128xi32>,
    %c2 = arith.constant 2 : index
    %c0_38 = arith.constant 0 : index
    %103 = vector.load %arg6[%c2, %c0_38] : memref<3x128xi32, #tpu.memory_space<vmem>>, vector<1x128xi32>
    tpu.vector_store %arg6[%c2, %c0_38], %100 {strides = array<i32>} : memref<3x128xi32, #tpu.memory_space<vmem>>, vector<1x128xi32>,
    return
  }
  func.func @transform_0(%arg0: i32) -> (i32, i32) {
    %c0_i32 = arith.constant 0 : i32
    %c0_i32_0 = arith.constant 0 : i32
    %c0_i32_1 = arith.constant 0 : i32
    return %c0_i32, %c0_i32_0 : i32, i32
  }
  func.func @transform_1(%arg0: i32) -> (i32, i32) {
    %c0_i32 = arith.constant 0 : i32
    %c0_i32_0 = arith.constant 0 : i32
    %c0_i32_1 = arith.constant 0 : i32
    return %c0_i32, %c0_i32_0 : i32, i32
  }
  func.func @transform_2(%arg0: i32) -> (i32, i32) {
    %c0_i32 = arith.constant 0 : i32
    %c0_i32_0 = arith.constant 0 : i32
    %c0_i32_1 = arith.constant 0 : i32
    return %c0_i32, %c0_i32_0 : i32, i32
  }
  func.func @transform_3(%arg0: i32) -> (i32, i32) {
    %c0_i32 = arith.constant 0 : i32
    %c0_i32_0 = arith.constant 0 : i32
    return %c0_i32, %arg0 : i32, i32
  }
  func.func @transform_4(%arg0: i32) -> (i32, i32) {
    %c0_i32 = arith.constant 0 : i32
    %c0_i32_0 = arith.constant 0 : i32
    return %c0_i32, %arg0 : i32, i32
  }
  func.func @transform_5(%arg0: i32) -> (i32, i32) {
    %c0_i32 = arith.constant 0 : i32
    %c0_i32_0 = arith.constant 0 : i32
    return %c0_i32, %arg0 : i32, i32
  }
}

</mosaic_0001>

<llo_original>
// kernel: tpu_custom_call.1
$region0: #{tpu_custom_call.1}
  #allocation0 [shape = 'u32[]', space=smem, size = 0x4, offset = 0x4, fixed_abs, tag = 'smem constant byte address 0x4 - core index']
  #allocation1 [shape = 'u32[144,128]{1,0:T(1,128)}', space=vmem, size = 0x12000, scoped, tag = 'internal scratch']
  %s0 = inlined_call_operand.vmem [shape: bf16[5,4], index: 0, kind: input, shape index: {}]
  %s1 = inlined_call_operand.vmem [shape: s32[4,3], index: 1, kind: input, shape index: {}]
  %s2 = inlined_call_operand.vmem [shape: s32[4,3], index: 2, kind: input, shape index: {}]
  %s3 = inlined_call_operand.vmem [shape: bf16[4,128], index: 3, kind: input, shape index: {}]
  %s4 = inlined_call_operand.vmem [shape: bf16[4,128], index: 4, kind: input, shape index: {}]
  %s5 = inlined_call_operand.hbm [shape: s32[3,128], index: 5, kind: output, shape index: {}]
  %s6 = sld [smem:[#allocation0]]
  $region30: #{tpu_custom_call.1} parent=0
    _
  %s8 = ssub.s32 1, %s6
  %s9 = scalar_select 0, %s8, %s6
  $region1: #{tpu_custom_call.1} parent=0
    #allocation2 [shape = 'u8[2048]{0}', space=vmem, size = 0x800, scoped, tag = 'output window, operand 0, single buffered']
    #allocation3 [shape = 's32[1]{0}', space=sflag, size = 0x4, scoped, tag = 'scoped memory for tpu_custom_call.1']
    %10 = vsyncpa [#allocation3], 0
    // Predicated region
    $region2: #{tpu_custom_call.1} parent=1 // pred_check
      _
    $region3: #{tpu_custom_call.1} parent=1 // pred_check_branch
      %12 = sbr.rel (0) target = $region5
    $region4: #{tpu_custom_call.1} parent=1 // pred_region
      _
    $region5: #{tpu_custom_call.1} parent=1 // pred_fallthru
      _
    // Predicated region
    $region6: #{tpu_custom_call.1} parent=1 // pred_check
      _
    $region7: #{tpu_custom_call.1} parent=1 // pred_check_branch
      %14 = sbr.rel (0) target = $region9
    $region8: #{tpu_custom_call.1} parent=1 // pred_region
      _
    $region9: #{tpu_custom_call.1} parent=1 // pred_fallthru
      _
    // Predicated region
    $region10: #{tpu_custom_call.1} parent=1 // pred_check
      _
    $region11: #{tpu_custom_call.1} parent=1 // pred_check_branch
      %16 = sbr.rel (0) target = $region13
    $region12: #{tpu_custom_call.1} parent=1 // pred_region
      _
    $region13: #{tpu_custom_call.1} parent=1 // pred_fallthru
      _
    // Predicated region
    $region14: #{tpu_custom_call.1} parent=1 // pred_check
      _
    $region15: #{tpu_custom_call.1} parent=1 // pred_check_branch
      %18 = sbr.rel (0) target = $region17
    $region16: #{tpu_custom_call.1} parent=1 // pred_region
      _
    $region17: #{tpu_custom_call.1} parent=1 // pred_fallthru
      _
    // Predicated region
    $region18: #{tpu_custom_call.1} parent=1 // pred_check
      _
    $region19: #{tpu_custom_call.1} parent=1 // pred_check_branch
      %20 = sbr.rel (0) target = $region21
    $region20: #{tpu_custom_call.1} parent=1 // pred_region
      _
    $region21: #{tpu_custom_call.1} parent=1 // pred_fallthru
      _
    %v24 = vld [vmem:[%s3] sm:$0x3]
    %v25 = vld [vmem:[%s4] sm:$0x3]
    %v26 = vld [vmem:[%s0] sm:$0x7]
    %vm27 = vcmask 31744
    %v29 = vsel %vm27, %v26, 0
    %vm31 = vcmask 1041408
    %v33 = vsel %vm31, %v24, 0
    %35 = vmatprep.subr.bf16.mxu0 0
    %36 = vmatpush1.bf16.msra.mxu0 %v33
    %37 = vmatprep.subr.bf16.mxu0 0
    %38 = vmatpush1.bf16.msra.mxu0 0
    %39 = vmatprep.subr.bf16.mxu0 0
    %40 = vmatpush1.bf16.msra.mxu0 0
    %41 = vmatprep.subr.bf16.mxu0 0
    %42 = vmatpush1.bf16.msra.mxu0 0
    %43 = vmatprep.subr.bf16.mxu0 0
    %44 = vmatpush1.bf16.msra.mxu0 0
    %45 = vmatprep.subr.bf16.mxu0 0
    %46 = vmatpush1.bf16.msra.mxu0 0
    %47 = vmatprep.subr.bf16.mxu0 0
    %48 = vmatpush1.bf16.msra.mxu0 0
    %49 = vmatprep.subr.bf16.mxu0 0
    %50 = vmatpush1.bf16.msra.mxu0 0
    %51 = vmatprep.subr.bf16.mxu0 0
    %52 = vmatpush1.bf16.msra.mxu0 0
    %53 = vmatprep.subr.bf16.mxu0 0
    %54 = vmatpush1.bf16.msra.mxu0 0
    %55 = vmatprep.subr.bf16.mxu0 0
    %56 = vmatpush1.bf16.msra.mxu0 0
    %57 = vmatprep.subr.bf16.mxu0 0
    %58 = vmatpush1.bf16.msra.mxu0 0
    %59 = vmatprep.subr.bf16.mxu0 0
    %60 = vmatpush1.bf16.msra.mxu0 0
    %61 = vmatprep.subr.bf16.mxu0 0
    %62 = vmatpush1.bf16.msra.mxu0 0
    %63 = vmatprep.subr.bf16.mxu0 0
    %64 = vmatpush1.bf16.msra.mxu0 0
    %65 = vmatprep.subr.bf16.mxu0 0
    %66 = vmatpush1.bf16.msra.mxu0 0
    %67 = vmatprep.mubr.bf16.mxu0 0
    %68 = vmatmul.mubr.bf16.gmra.mrb[0].mxu0 %v29
    %v69 = vpop.f32.mrb[0].mxu0
    %v70 = vadd.f32 0.0, %v69
    %v71 = vpop.f32.mrb[0].mxu0
    %v72 = vpop.f32.mrb[0].mxu0
    %v73 = vpop.f32.mrb[0].mxu0
    %74 = vdwg.mxu0
    %v75 = vcvt.f32.s32.to.zero.pseudo %v70
    %v76 = vsub.s32 2, %v75
    %vm77 = vcmp.gt.s32.totalorder %v76, 0
    %v78 = vsel %vm77, %v76, 0
    %vm79 = vcmp.lt.s32.totalorder %v78, 2
    %v80 = vsel %vm79, %v78, 2
    %v81 = vld [vmem:[%s1] sm:$0xf]
    %vm82 = vcmp.eq.s32.totalorder %v80, 0
    %83 = vset.pattern.permute.xlu0 0
    %84 = vperm.xlu0 %83, %v81
    %v85 = vpop.permute.xlu0 %84
    %v86 = vsel %vm82, %v85, 0
    %vm87 = vcmp.eq.s32.totalorder %v80, 1
    %88 = vset.pattern.permute.xlu0 1
    %89 = vperm.xlu0 %88, %v81
    %v90 = vpop.permute.xlu0 %89
    %v91 = vsel %vm87, %v90, 0
    %v92 = vadd.s32 %v86, %v91
    %vm93 = vcmp.eq.s32.totalorder %v80, 2
    %94 = vset.pattern.permute.xlu0 2
    %95 = vperm.xlu0 %94, %v81
    %v96 = vpop.permute.xlu0 %95
    %v97 = vsel %vm93, %v96, 0
    %v98 = vadd.s32 %v92, %v97
    %vm99 = vcmp.ne.bf16.partialorder %v24, 0
    %v100 = vsel %vm99, 65537, 0
    %v101 = vunpack.c.l.b16 %v100
    %vm102 = vcmp.ne.s32.totalorder %v101, 0
    %v103 = vsel %vm102, %v98, 0
    %vm104 = vcmask 1043456
    %v105 = vsel %vm104, %v103, 0
    %v106 = vrot.slane %v105, 4
    %v107 = vadd.s32 %v105, %v106
    %v108 = vrot.slane %v107, 2
    %v109 = vadd.s32 %v107, %v108
    %v110 = vrot.slane %v109, 1
    %v111 = vadd.s32 %v109, %v110
    %v113 = vsel %vm31, %v25, 0
    %115 = vmatprep.subr.bf16.mxu0 0
    %116 = vmatpush1.bf16.msra.mxu0 %v113
    %117 = vmatprep.subr.bf16.mxu0 0
    %118 = vmatpush1.bf16.msra.mxu0 0
    %119 = vmatprep.subr.bf16.mxu0 0
    %120 = vmatpush1.bf16.msra.mxu0 0
    %121 = vmatprep.subr.bf16.mxu0 0
    %122 = vmatpush1.bf16.msra.mxu0 0
    %123 = vmatprep.subr.bf16.mxu0 0
    %124 = vmatpush1.bf16.msra.mxu0 0
    %125 = vmatprep.subr.bf16.mxu0 0
    %126 = vmatpush1.bf16.msra.mxu0 0
    %127 = vmatprep.subr.bf16.mxu0 0
    %128 = vmatpush1.bf16.msra.mxu0 0
    %129 = vmatprep.subr.bf16.mxu0 0
    %130 = vmatpush1.bf16.msra.mxu0 0
    %131 = vmatprep.subr.bf16.mxu0 0
    %132 = vmatpush1.bf16.msra.mxu0 0
    %133 = vmatprep.subr.bf16.mxu0 0
    %134 = vmatpush1.bf16.msra.mxu0 0
    %135 = vmatprep.subr.bf16.mxu0 0
    %136 = vmatpush1.bf16.msra.mxu0 0
    %137 = vmatprep.subr.bf16.mxu0 0
    %138 = vmatpush1.bf16.msra.mxu0 0
    %139 = vmatprep.subr.bf16.mxu0 0
    %140 = vmatpush1.bf16.msra.mxu0 0
    %141 = vmatprep.subr.bf16.mxu0 0
    %142 = vmatpush1.bf16.msra.mxu0 0
    %143 = vmatprep.subr.bf16.mxu0 0
    %144 = vmatpush1.bf16.msra.mxu0 0
    %145 = vmatprep.subr.bf16.mxu0 0
    %146 = vmatpush1.bf16.msra.mxu0 0
    %147 = vmatprep.mubr.bf16.mxu0 0
    %148 = vmatmul.mubr.bf16.gmra.mrb[0].mxu0 %v29
    %v149 = vpop.f32.mrb[0].mxu0
    %v150 = vadd.f32 0.0, %v149
    %v151 = vpop.f32.mrb[0].mxu0
    %v152 = vpop.f32.mrb[0].mxu0
    %v153 = vpop.f32.mrb[0].mxu0
    %154 = vdwg.mxu0
    %v155 = vcvt.f32.s32.to.zero.pseudo %v150
    %v156 = vsub.s32 2, %v155
    %vm157 = vcmp.gt.s32.totalorder %v156, 0
    %v158 = vsel %vm157, %v156, 0
    %vm159 = vcmp.lt.s32.totalorder %v158, 2
    %v160 = vsel %vm159, %v158, 2
    %v161 = vld [vmem:[%s2] sm:$0xf]
    %vm162 = vcmp.eq.s32.totalorder %v160, 0
    %163 = vset.pattern.permute.xlu0 0
    %164 = vperm.xlu0 %163, %v161
    %v165 = vpop.permute.xlu0 %164
    %v166 = vsel %vm162, %v165, 0
    %vm167 = vcmp.eq.s32.totalorder %v160, 1
    %168 = vset.pattern.permute.xlu0 1
    %169 = vperm.xlu0 %168, %v161
    %v170 = vpop.permute.xlu0 %169
    %v171 = vsel %vm167, %v170, 0
    %v172 = vadd.s32 %v166, %v171
    %vm173 = vcmp.eq.s32.totalorder %v160, 2
    %174 = vset.pattern.permute.xlu0 2
    %175 = vperm.xlu0 %174, %v161
    %v176 = vpop.permute.xlu0 %175
    %v177 = vsel %vm173, %v176, 0
    %v178 = vadd.s32 %v172, %v177
    %vm179 = vcmp.ne.bf16.partialorder %v25, 0
    %v180 = vsel %vm179, 65537, 0
    %v181 = vunpack.c.l.b16 %v180
    %vm182 = vcmp.ne.s32.totalorder %v181, 0
    %v183 = vsel %vm182, %v178, 0
    %v184 = vsel %vm104, %v183, 0
    %v185 = vrot.slane %v184, 4
    %v186 = vadd.s32 %v184, %v185
    %v187 = vrot.slane %v186, 2
    %v188 = vadd.s32 %v186, %v187
    %v189 = vrot.slane %v188, 1
    %v190 = vadd.s32 %v188, %v189
    %vm191 = vcmp.eq.s32.totalorder %v75, 2
    %vm192 = vcmp.eq.s32.totalorder %v155, 2
    %vm193 = vmand %vm191, %vm192
    %v194 = vsel %vm193, 1, 0
    %v195 = vmul.u32 %v111, %v194
    %v196 = vmul.u32 %v190, %v194
    %v197 = vshra.s32 %v196, 7
    %v198 = vand.u32 %v196, 127
    %v199 = vsel %vm193, %v198, 128
    %200 = vst [vmem:[#allocation2 - $0x4] sm:$0x10] %v195
    %201 = vst [vmem:[#allocation2 - $0x3] sm:$0x10] %v197
    %202 = vst [vmem:[#allocation2 - $0x2] sm:$0x10] %v199
    // Predicated region
    $region22: #{tpu_custom_call.1} parent=1 // pred_check
      _
    $region23: #{tpu_custom_call.1} parent=1 // pred_check_branch
      %204 = sbr.rel (0) target = $region25
    $region24: #{tpu_custom_call.1} parent=1 // pred_region
      %s206 = ssub.s32 64, 64
      %207 = vsyncadd [#allocation3], %s206
      %s209 = sshll.u32 [#allocation2], 4
      %s210 = int_to_ptr.vmem [resolvable:$true] %s209
      %212 = dma.vmem_to_hbm [thread:$0]  %s210, 64, %s5, [#allocation3]
    $region25: #{tpu_custom_call.1} parent=1 // pred_fallthru
      _
    // Predicated region
    $region26: #{tpu_custom_call.1} parent=1 // pred_check
      _
    $region27: #{tpu_custom_call.1} parent=1 // pred_check_branch
      %214 = sbr.rel (0) target = $region29
    $region28: #{tpu_custom_call.1} parent=1 // pred_region
      %215 = dma.done [#allocation3], 64
    $region29: #{tpu_custom_call.1} parent=1 // pred_fallthru
      _
    %216 = vsyncpa [#allocation3], 1

</llo_original>
